<compile_context>
chip_gen: v6e
topology: v6e:2x2x1
jax: 0.10.0
libtpu: 0.0.40
codegen_flags: <defaults>
</compile_context>

<pallas_src>
import jax
import jax.numpy as jnp
from jax.experimental import pallas as pl
from jax.experimental.pallas import tpu as pltpu

INPUT_DIM = 64
HIDDEN_DIM = 10
OUTPUT_DIM = 10
LANE = 128  # pad narrow feature dims to the full lane width (minimum legal)


def _round_up(n, m):
    return ((n + m - 1) // m) * m


def mlp_kernel(x_ref, w1_ref, b1_ref, w2_ref, b2_ref, o_ref):
    # layer_1: Linear(input_dim -> hid_p) + ReLU, f32 accumulation on the MXU.
    h = jnp.dot(x_ref[...], w1_ref[...], preferred_element_type=jnp.float32)
    h = jnp.maximum(h + b1_ref[...], 0.0)
    # layer_2: Linear(hid_p -> out_p) + sigmoid (exact; stable since exp(-z)->inf
    # gives 1/inf = 0 for very negative z).
    z = jnp.dot(h, w2_ref[...], preferred_element_type=jnp.float32) + b2_ref[...]
    s = 1.0 / (1.0 + jnp.exp(-z))
    # Store only the real OUTPUT_DIM columns: output HBM stream is 40 B/row
    # instead of 512 B/row (masked lane store; store-issue slots have slack
    # because the kernel is HBM-bound).
    o_ref[...] = s[:, : o_ref.shape[-1]].astype(o_ref.dtype)


def neural_network_forward(x, w1, b1, w2, b2, *, block_batch=2048):
    """Forward pass of the 2-layer MLP (Linear+ReLU, Linear+sigmoid).

    x:  [batch, INPUT_DIM] float32
    w1: [INPUT_DIM, HIDDEN_DIM], b1: [HIDDEN_DIM] or [1, HIDDEN_DIM]
    w2: [HIDDEN_DIM, OUTPUT_DIM], b2: [OUTPUT_DIM] or [1, OUTPUT_DIM]
    Returns [batch, OUTPUT_DIM] float32.
    """
    batch, in_dim = x.shape
    hid = w1.shape[1]
    out_dim = w2.shape[1]

    x = jnp.asarray(x, jnp.float32)
    b1 = jnp.asarray(b1, jnp.float32).reshape(1, -1)
    b2 = jnp.asarray(b2, jnp.float32).reshape(1, -1)

    # Zero-pad hidden/output feature dims of the (tiny, VMEM-resident) weights to
    # 128 lanes. Exact: ReLU(0) = 0 and padded W2 rows are zero.
    hid_p = _round_up(hid, LANE)
    out_p = _round_up(out_dim, LANE)
    w1p = jnp.zeros((in_dim, hid_p), jnp.float32).at[:, :hid].set(w1)
    b1p = jnp.zeros((1, hid_p), jnp.float32).at[:, :hid].set(b1)
    w2p = jnp.zeros((hid_p, out_p), jnp.float32).at[:hid, :out_dim].set(w2)
    b2p = jnp.zeros((1, out_p), jnp.float32).at[:, :out_dim].set(b2)

    # Batch tile: big enough to amortize per-grid-step overhead, capped so the
    # double-buffered x tile + output tile + temps stay well inside v5e's 16 MiB
    # scoped-VMEM default (and v7x's 32 MiB per-TC default).
    tb = max(8, min(_round_up(block_batch, 8), _round_up(batch, 8)))
    grid = (pl.cdiv(batch, tb),)  # ragged last tile: OOB writes are clipped

    out = pl.pallas_call(
        mlp_kernel,
        out_shape=jax.ShapeDtypeStruct((batch, out_dim), jnp.float32),
        grid_spec=pl.GridSpec(
            grid=grid,
            in_specs=[
                pl.BlockSpec((tb, in_dim), lambda i: (i, 0)),      # x tile streams
                pl.BlockSpec((in_dim, hid_p), lambda i: (0, 0)),   # W1 resident
                pl.BlockSpec((1, hid_p), lambda i: (0, 0)),        # b1 resident
                pl.BlockSpec((hid_p, out_p), lambda i: (0, 0)),    # W2 resident
                pl.BlockSpec((1, out_p), lambda i: (0, 0)),        # b2 resident
            ],
            out_specs=pl.BlockSpec((tb, out_dim), lambda i: (i, 0)),  # narrow out
        ),
        compiler_params=pltpu.CompilerParams(
            # Rows are independent -> shard grid steps across both TCs on v7x.
            dimension_semantics=("parallel",),
        ),
    )(x, w1p, b1p, w2p, b2p)

    return out


def init_params(key):
    """Deterministic init mimicking PyTorch nn.Linear default (U[-1/sqrt(fan_in), 1/sqrt(fan_in)])."""
    k1, k2, k3, k4 = jax.random.split(key, 4)
    bound1 = 1.0 / jnp.sqrt(jnp.float32(INPUT_DIM))
    bound2 = 1.0 / jnp.sqrt(jnp.float32(HIDDEN_DIM))
    w1 = jax.random.uniform(k1, (INPUT_DIM, HIDDEN_DIM), jnp.float32, -bound1, bound1)
    b1 = jax.random.uniform(k2, (1, HIDDEN_DIM), jnp.float32, -bound1, bound1)
    w2 = jax.random.uniform(k3, (HIDDEN_DIM, OUTPUT_DIM), jnp.float32, -bound2, bound2)
    b2 = jax.random.uniform(k4, (1, OUTPUT_DIM), jnp.float32, -bound2, bound2)
    return w1, b1, w2, b2


def _reference(x, w1, b1, w2, b2):
    # Same math as the PyTorch module, with exact-f32 matmuls.
    h = jnp.maximum(jnp.dot(x, w1, precision="highest") + b1, 0.0)
    return jax.nn.sigmoid(jnp.dot(h, w2, precision="highest") + b2)


if __name__ == "__main__":
    key = jax.random.PRNGKey(0)
    pkey, xkey, xkey2 = jax.random.split(key, 3)
    w1, b1, w2, b2 = init_params(pkey)

    # Small, single-tile case.
    batch = 8
    x = jax.random.normal(xkey, (batch, INPUT_DIM), jnp.float32)
    ref = _reference(x, w1, b1, w2, b2)
    out = jax.block_until_ready(neural_network_forward(x, w1, b1, w2, b2))
    assert out.shape == (batch, OUTPUT_DIM)
    # Tolerance absorbs the MXU's default matmul precision (operands may be
    # rounded to bf16 per pass); sigmoid outputs are in [0, 1].
    assert jnp.allclose(out, ref, atol=1e-2), (
        "mismatch vs reference, max abs err = "
        f"{float(jnp.max(jnp.abs(out - ref)))}")

    # Multi-tile case with a ragged last batch tile (exercises grid clipping).
    batch2 = 300
    x2 = jax.random.normal(xkey2, (batch2, INPUT_DIM), jnp.float32)
    ref2 = _reference(x2, w1, b1, w2, b2)
    out2 = jax.block_until_ready(
        neural_network_forward(x2, w1, b1, w2, b2, block_batch=128))
    assert out2.shape == (batch2, OUTPUT_DIM)
    assert jnp.allclose(out2, ref2, atol=1e-2), (
        "ragged-tile mismatch vs reference, max abs err = "
        f"{float(jnp.max(jnp.abs(out2 - ref2)))}")

    print("KERNEL_OK")
</pallas_src>

<mosaic_0001>
module attributes {stable_mosaic.version = 11 : i64} {
  func.func @mlp_kernel(%arg0: i32, %arg1: memref<8x64xf32, #tpu.memory_space<vmem>>, %arg2: memref<64x128xf32, #tpu.memory_space<vmem>>, %arg3: memref<1x128xf32, #tpu.memory_space<vmem>>, %arg4: memref<128x128xf32, #tpu.memory_space<vmem>>, %arg5: memref<1x128xf32, #tpu.memory_space<vmem>>, %arg6: memref<8x10xf32, #tpu.memory_space<vmem>>) attributes {dimension_semantics = [#tpu.dimension_semantics<parallel>], iteration_bounds = array<i64: 1>, scalar_prefetch = 0 : i64, scratch_operands = 0 : i64, tpu.core_type = #tpu.core_type<tc>, window_params = [{transform_indices = @transform_0, window_bounds = array<i64: 8, 64>}, {pipeline_mode = #tpu.pipeline_mode<synchronous>, transform_indices = @transform_1, window_bounds = array<i64: 64, 128>}, {pipeline_mode = #tpu.pipeline_mode<synchronous>, transform_indices = @transform_2, window_bounds = array<i64: 1, 128>}, {pipeline_mode = #tpu.pipeline_mode<synchronous>, transform_indices = @transform_3, window_bounds = array<i64: 128, 128>}, {pipeline_mode = #tpu.pipeline_mode<synchronous>, transform_indices = @transform_4, window_bounds = array<i64: 1, 128>}, {transform_indices = @transform_5, window_bounds = array<i64: 8, 10>}]} {
    %c0 = arith.constant 0 : index
    %c0_0 = arith.constant 0 : index
    %0 = vector.load %arg1[%c0, %c0_0] : memref<8x64xf32, #tpu.memory_space<vmem>>, vector<8x64xf32>
    %c0_1 = arith.constant 0 : index
    %c0_2 = arith.constant 0 : index
    %1 = vector.load %arg2[%c0_1, %c0_2] : memref<64x128xf32, #tpu.memory_space<vmem>>, vector<64x128xf32>
    %cst = arith.constant dense<0.000000e+00> : vector<8x128xf32>
    %2 = tpu.matmul %0, %1, %cst {dimension_numbers = #tpu.dot_dimension_numbers<[1], [0], [0], [1], [0, 0, 1, 1], [], []>} : vector<8x64xf32>, vector<64x128xf32>, vector<8x128xf32> -> vector<8x128xf32>
    %c0_3 = arith.constant 0 : index
    %c0_4 = arith.constant 0 : index
    %3 = vector.load %arg3[%c0_3, %c0_4] : memref<1x128xf32, #tpu.memory_space<vmem>>, vector<1x128xf32>
    %4 = vector.broadcast %3 : vector<1x128xf32> to vector<8x128xf32>
    %5 = arith.addf %2, %4 : vector<8x128xf32>
    %cst_5 = arith.constant 0.000000e+00 : f32
    %6 = vector.broadcast %cst_5 : f32 to vector<8x128xf32>
    %7 = arith.maximumf %5, %6 : vector<8x128xf32>
    %c0_6 = arith.constant 0 : index
    %c0_7 = arith.constant 0 : index
    %8 = vector.load %arg4[%c0_6, %c0_7] : memref<128x128xf32, #tpu.memory_space<vmem>>, vector<128x128xf32>
    %cst_8 = arith.constant dense<0.000000e+00> : vector<8x128xf32>
    %9 = tpu.matmul %7, %8, %cst_8 {dimension_numbers = #tpu.dot_dimension_numbers<[1], [0], [0], [1], [0, 0, 1, 1], [], []>} : vector<8x128xf32>, vector<128x128xf32>, vector<8x128xf32> -> vector<8x128xf32>
    %c0_9 = arith.constant 0 : index
    %c0_10 = arith.constant 0 : index
    %10 = vector.load %arg5[%c0_9, %c0_10] : memref<1x128xf32, #tpu.memory_space<vmem>>, vector<1x128xf32>
    %11 = vector.broadcast %10 : vector<1x128xf32> to vector<8x128xf32>
    %12 = arith.addf %9, %11 : vector<8x128xf32>
    %cst_11 = arith.constant 0.000000e+00 : f32
    %13 = vector.broadcast %cst_11 : f32 to vector<8x128xf32>
    %14 = arith.subf %13, %12 : vector<8x128xf32>
    %15 = math.exp %14 : vector<8x128xf32>
    %cst_12 = arith.constant 1.000000e+00 : f32
    %16 = vector.broadcast %cst_12 : f32 to vector<8x128xf32>
    %17 = arith.addf %16, %15 : vector<8x128xf32>
    %cst_13 = arith.constant 1.000000e+00 : f32
    %18 = vector.broadcast %cst_13 : f32 to vector<8x128xf32>
    %19 = arith.divf %18, %17 : vector<8x128xf32>
    %20 = vector.extract_strided_slice %19 {offsets = [0, 0], sizes = [8, 10], strides = [1, 1]} : vector<8x128xf32> to vector<8x10xf32>
    %c0_14 = arith.constant 0 : index
    %c0_15 = arith.constant 0 : index
    %21 = vector.load %arg6[%c0_14, %c0_15] : memref<8x10xf32, #tpu.memory_space<vmem>>, vector<8x10xf32>
    tpu.vector_store %arg6[%c0_14, %c0_15], %20 {strides = array<i32>} : memref<8x10xf32, #tpu.memory_space<vmem>>, vector<8x10xf32>,
    return
  }
  func.func @transform_0(%arg0: i32) -> (i32, i32) {
    %c0_i32 = arith.constant 0 : i32
    %c0_i32_0 = arith.constant 0 : i32
    return %arg0, %c0_i32 : i32, i32
  }
  func.func @transform_1(%arg0: i32) -> (i32, i32) {
    %c0_i32 = arith.constant 0 : i32
    %c0_i32_0 = arith.constant 0 : i32
    %c0_i32_1 = arith.constant 0 : i32
    return %c0_i32, %c0_i32_0 : i32, i32
  }
  func.func @transform_2(%arg0: i32) -> (i32, i32) {
    %c0_i32 = arith.constant 0 : i32
    %c0_i32_0 = arith.constant 0 : i32
    %c0_i32_1 = arith.constant 0 : i32
    return %c0_i32, %c0_i32_0 : i32, i32
  }
  func.func @transform_3(%arg0: i32) -> (i32, i32) {
    %c0_i32 = arith.constant 0 : i32
    %c0_i32_0 = arith.constant 0 : i32
    %c0_i32_1 = arith.constant 0 : i32
    return %c0_i32, %c0_i32_0 : i32, i32
  }
  func.func @transform_4(%arg0: i32) -> (i32, i32) {
    %c0_i32 = arith.constant 0 : i32
    %c0_i32_0 = arith.constant 0 : i32
    %c0_i32_1 = arith.constant 0 : i32
    return %c0_i32, %c0_i32_0 : i32, i32
  }
  func.func @transform_5(%arg0: i32) -> (i32, i32) {
    %c0_i32 = arith.constant 0 : i32
    %c0_i32_0 = arith.constant 0 : i32
    return %arg0, %c0_i32 : i32, i32
  }
}

</mosaic_0001>

<llo_original>
// kernel: tpu_custom_call.1
$region0: #{tpu_custom_call.1}
  #allocation0 [shape = 'u32[]', space=smem, size = 0x4, offset = 0x4, fixed_abs, tag = 'smem constant byte address 0x4 - core index']
  #allocation1 [shape = 'u32[144,128]{1,0:T(1,128)}', space=vmem, size = 0x12000, scoped, tag = 'internal scratch']
  %s0 = inlined_call_operand.hbm [shape: f32[8,64], index: 0, kind: input, shape index: {}]
  %s1 = inlined_call_operand.hbm [shape: f32[64,128], index: 1, kind: input, shape index: {}]
  %s2 = inlined_call_operand.vmem [shape: f32[1,128], index: 2, kind: input, shape index: {}]
  %s3 = inlined_call_operand.hbm [shape: f32[128,128], index: 3, kind: input, shape index: {}]
  %s4 = inlined_call_operand.vmem [shape: f32[1,128], index: 4, kind: input, shape index: {}]
  %s5 = inlined_call_operand.hbm [shape: f32[8,10], index: 5, kind: output, shape index: {}]
  %s6 = sld [smem:[#allocation0]]
  $region42: #{tpu_custom_call.1} parent=0
    _
  %s8 = ssub.s32 1, %s6
  %s9 = scalar_select 0, %s8, %s6
  $region1: #{tpu_custom_call.1} parent=0
    #allocation2 [shape = 'u8[4096]{0}', space=vmem, size = 0x1000, scoped, tag = 'input window, operand 0, single buffered']
    #allocation3 [shape = 's32[1]{0}', space=sflag, size = 0x4, scoped, tag = 'scoped memory for tpu_custom_call.1']
    #allocation4 [shape = 's32[1]{0}', space=sflag, size = 0x4, scoped, tag = 'scoped memory for tpu_custom_call.1']
    #allocation5 [shape = 'u8[32768]{0}', space=vmem, size = 0x8000, scoped, tag = 'input window, operand 1, single buffered']
    #allocation6 [shape = 's32[1]{0}', space=sflag, size = 0x4, scoped, tag = 'scoped memory for tpu_custom_call.1']
    #allocation7 [shape = 'u8[65536]{0}', space=vmem, size = 0x10000, scoped, tag = 'input window, operand 3, single buffered']
    #allocation8 [shape = 'u8[4096]{0}', space=vmem, size = 0x1000, scoped, tag = 'output window, operand 0, single buffered']
    %10 = vsyncpa [#allocation3], 0
    %11 = vsyncpa [#allocation6], 0
    %12 = vsyncpa [#allocation4], 0
    // Predicated region
    $region2: #{tpu_custom_call.1} parent=1 // pred_check
      _
    $region3: #{tpu_custom_call.1} parent=1 // pred_check_branch
      %14 = sbr.rel (0) target = $region5
    $region4: #{tpu_custom_call.1} parent=1 // pred_region
      %s16 = ssub.s32 128, 128
      %17 = vsyncadd [#allocation3], %s16
      %s19 = sshll.u32 [#allocation2], 4
      %s20 = int_to_ptr.vmem [resolvable:$true] %s19
      %22 = dma.hbm_to_vmem [thread:$0]  %s0, 128, %s20, [#allocation3]
    $region5: #{tpu_custom_call.1} parent=1 // pred_fallthru
      _
    // Predicated region
    $region6: #{tpu_custom_call.1} parent=1 // pred_check
      _
    $region7: #{tpu_custom_call.1} parent=1 // pred_check_branch
      %24 = sbr.rel (0) target = $region9
    $region8: #{tpu_custom_call.1} parent=1 // pred_region
      %s26 = ssub.s32 1024, 1024
      %27 = vsyncadd [#allocation6], %s26
      %s28 = sshll.u32 [#allocation5], 4
      %s29 = int_to_ptr.vmem [resolvable:$true] %s28
      %34 = dma.hbm_to_vmem [thread:$0]  %s1, 1024, %s29, [#allocation6], 128, 128, 8
    $region9: #{tpu_custom_call.1} parent=1 // pred_fallthru
      _
    // Predicated region
    $region10: #{tpu_custom_call.1} parent=1 // pred_check
      _
    $region11: #{tpu_custom_call.1} parent=1 // pred_check_branch
      %36 = sbr.rel (0) target = $region13
    $region12: #{tpu_custom_call.1} parent=1 // pred_region
      _
    $region13: #{tpu_custom_call.1} parent=1 // pred_fallthru
      _
    // Predicated region
    $region14: #{tpu_custom_call.1} parent=1 // pred_check
      _
    $region15: #{tpu_custom_call.1} parent=1 // pred_check_branch
      %38 = sbr.rel (0) target = $region17
    $region16: #{tpu_custom_call.1} parent=1 // pred_region
      %s40 = ssub.s32 2048, 2048
      %41 = vsyncadd [#allocation6], %s40
      %s42 = sshll.u32 [#allocation7], 4
      %s43 = int_to_ptr.vmem [resolvable:$true] %s42
      %48 = dma.hbm_to_vmem [thread:$0]  %s3, 2048, %s43, [#allocation6], 128, 128, 8
    $region17: #{tpu_custom_call.1} parent=1 // pred_fallthru
      _
    // Predicated region
    $region18: #{tpu_custom_call.1} parent=1 // pred_check
      _
    $region19: #{tpu_custom_call.1} parent=1 // pred_check_branch
      %50 = sbr.rel (0) target = $region21
    $region20: #{tpu_custom_call.1} parent=1 // pred_region
      _
    $region21: #{tpu_custom_call.1} parent=1 // pred_fallthru
      _
    // Predicated region
    $region22: #{tpu_custom_call.1} parent=1 // pred_check
      _
    $region23: #{tpu_custom_call.1} parent=1 // pred_check_branch
      %52 = sbr.rel (0) target = $region25
    $region24: #{tpu_custom_call.1} parent=1 // pred_region
      %53 = dma.done [#allocation3], 128
    $region25: #{tpu_custom_call.1} parent=1 // pred_fallthru
      _
    // Predicated region
    $region26: #{tpu_custom_call.1} parent=1 // pred_check
      _
    $region27: #{tpu_custom_call.1} parent=1 // pred_check_branch
      %55 = sbr.rel (0) target = $region29
    $region28: #{tpu_custom_call.1} parent=1 // pred_region
      %56 = dma.done [#allocation6], 1024
    $region29: #{tpu_custom_call.1} parent=1 // pred_fallthru
      _
    // Predicated region
    $region30: #{tpu_custom_call.1} parent=1 // pred_check
      _
    $region31: #{tpu_custom_call.1} parent=1 // pred_check_branch
      %58 = sbr.rel (0) target = $region33
    $region32: #{tpu_custom_call.1} parent=1 // pred_region
      %59 = dma.done [#allocation6], 2048
    $region33: #{tpu_custom_call.1} parent=1 // pred_fallthru
      _
    %v60 = vld [vmem:[#allocation2] sm:$0xff]
    %v61 = vld [vmem:[#allocation5] sm:$0xff]
    %v62 = vld [vmem:[#allocation5 + $0x8] sm:$0xff]
    %v63 = vld [vmem:[#allocation5 + $0x10] sm:$0xff]
    %v64 = vld [vmem:[#allocation5 + $0x18] sm:$0xff]
    %v65 = vld [vmem:[#allocation5 + $0x20] sm:$0xff]
    %v66 = vld [vmem:[#allocation5 + $0x28] sm:$0xff]
    %v67 = vld [vmem:[#allocation5 + $0x30] sm:$0xff]
    %v68 = vld [vmem:[#allocation5 + $0x38] sm:$0xff]
    %v69 = vld [vmem:[%s2] sm:$0x1]
    %v71 = vlaneseq
    %v72 = vshrl.u32 %v71, 7
    %v73 = vsub.s32 0, %v72
    %v74 = vrot.slane %v69, %v73
    %vm76 = vcmask 523264
    %v78 = vsel %vm76, %v60, 0
    %80 = vmatprep.subr.mxu0 0.0
    %81 = vmatpush1.msra.mxu0 0.0
    %82 = vmatprep.subr.mxu0 0.0
    %83 = vmatpush1.msra.mxu0 0.0
    %84 = vmatprep.subr.mxu0 0.0
    %85 = vmatpush1.msra.mxu0 0.0
    %86 = vmatprep.subr.mxu0 0.0
    %87 = vmatpush1.msra.mxu0 0.0
    %88 = vmatprep.subr.mxu0 0.0
    %89 = vmatpush1.msra.mxu0 0.0
    %90 = vmatprep.subr.mxu0 0.0
    %91 = vmatpush1.msra.mxu0 0.0
    %92 = vmatprep.subr.mxu0 0.0
    %93 = vmatpush1.msra.mxu0 0.0
    %94 = vmatprep.subr.mxu0 0.0
    %95 = vmatpush1.msra.mxu0 0.0
    %96 = vmatprep.subr.mxu0 0.0
    %97 = vmatpush1.msra.mxu0 %v68
    %98 = vmatprep.subr.mxu0 0.0
    %99 = vmatpush1.msra.mxu0 %v67
    %100 = vmatprep.subr.mxu0 0.0
    %101 = vmatpush1.msra.mxu0 %v66
    %102 = vmatprep.subr.mxu0 0.0
    %103 = vmatpush1.msra.mxu0 %v65
    %104 = vmatprep.subr.mxu0 0.0
    %105 = vmatpush1.msra.mxu0 %v64
    %106 = vmatprep.subr.mxu0 0.0
    %107 = vmatpush1.msra.mxu0 %v63
    %108 = vmatprep.subr.mxu0 0.0
    %109 = vmatpush1.msra.mxu0 %v62
    %110 = vmatprep.subr.mxu0 0.0
    %111 = vmatpush1.msra.mxu0 %v61
    %112 = vmatprep.subr.mxu0 0.0
    %113 = vmatpush2.msra.mxu0 0.0
    %114 = vmatprep.subr.mxu0 0.0
    %115 = vmatpush2.msra.mxu0 0.0
    %116 = vmatprep.subr.mxu0 0.0
    %117 = vmatpush2.msra.mxu0 0.0
    %118 = vmatprep.subr.mxu0 0.0
    %119 = vmatpush2.msra.mxu0 0.0
    %120 = vmatprep.subr.mxu0 0.0
    %121 = vmatpush2.msra.mxu0 0.0
    %122 = vmatprep.subr.mxu0 0.0
    %123 = vmatpush2.msra.mxu0 0.0
    %124 = vmatprep.subr.mxu0 0.0
    %125 = vmatpush2.msra.mxu0 0.0
    %126 = vmatprep.subr.mxu0 0.0
    %127 = vmatpush2.msra.mxu0 0.0
    %128 = vmatprep.subr.mxu0 0.0
    %129 = vmatpush2.msra.mxu0 0.0
    %130 = vmatprep.subr.mxu0 0.0
    %131 = vmatpush2.msra.mxu0 0.0
    %132 = vmatprep.subr.mxu0 0.0
    %133 = vmatpush2.msra.mxu0 0.0
    %134 = vmatprep.subr.mxu0 0.0
    %135 = vmatpush2.msra.mxu0 0.0
    %136 = vmatprep.subr.mxu0 0.0
    %137 = vmatpush2.msra.mxu0 0.0
    %138 = vmatprep.subr.mxu0 0.0
    %139 = vmatpush2.msra.mxu0 0.0
    %140 = vmatprep.subr.mxu0 0.0
    %141 = vmatpush2.msra.mxu0 0.0
    %142 = vmatprep.subr.mxu0 0.0
    %143 = vmatpush2.msra.mxu0 0.0
    %144 = vmatprep.mubr.f32.mxu0 0.0
    %145 = vmatmul.mubr.f32.gmra.mxu0 %v78
    %v146 = vpop.f32.mrf.mxu0
    %v147 = vadd.f32 %v74, %v146
    %v148 = vpop.f32.mrf.mxu0
    %149 = vdwg.mxu0
    %v150 = vmax.f32 %v147, 0.0
    %v151 = vld [vmem:[#allocation7] sm:$0xff]
    %v152 = vld [vmem:[#allocation7 + $0x8] sm:$0xff]
    %v153 = vld [vmem:[#allocation7 + $0x10] sm:$0xff]
    %v154 = vld [vmem:[#allocation7 + $0x18] sm:$0xff]
    %v155 = vld [vmem:[#allocation7 + $0x20] sm:$0xff]
    %v156 = vld [vmem:[#allocation7 + $0x28] sm:$0xff]
    %v157 = vld [vmem:[#allocation7 + $0x30] sm:$0xff]
    %v158 = vld [vmem:[#allocation7 + $0x38] sm:$0xff]
    %v159 = vld [vmem:[#allocation7 + $0x40] sm:$0xff]
    %v160 = vld [vmem:[#allocation7 + $0x48] sm:$0xff]
    %v161 = vld [vmem:[#allocation7 + $0x50] sm:$0xff]
    %v162 = vld [vmem:[#allocation7 + $0x58] sm:$0xff]
    %v163 = vld [vmem:[#allocation7 + $0x60] sm:$0xff]
    %v164 = vld [vmem:[#allocation7 + $0x68] sm:$0xff]
    %v165 = vld [vmem:[#allocation7 + $0x70] sm:$0xff]
    %v166 = vld [vmem:[#allocation7 + $0x78] sm:$0xff]
    %v167 = vld [vmem:[%s4] sm:$0x1]
    %v169 = vlaneseq
    %v170 = vshrl.u32 %v169, 7
    %v171 = vsub.s32 0, %v170
    %v172 = vrot.slane %v167, %v171
    %174 = vmatprep.subr.mxu0 0.0
    %175 = vmatpush1.msra.mxu0 %v166
    %176 = vmatprep.subr.mxu0 0.0
    %177 = vmatpush1.msra.mxu0 %v165
    %178 = vmatprep.subr.mxu0 0.0
    %179 = vmatpush1.msra.mxu0 %v164
    %180 = vmatprep.subr.mxu0 0.0
    %181 = vmatpush1.msra.mxu0 %v163
    %182 = vmatprep.subr.mxu0 0.0
    %183 = vmatpush1.msra.mxu0 %v162
    %184 = vmatprep.subr.mxu0 0.0
    %185 = vmatpush1.msra.mxu0 %v161
    %186 = vmatprep.subr.mxu0 0.0
    %187 = vmatpush1.msra.mxu0 %v160
    %188 = vmatprep.subr.mxu0 0.0
    %189 = vmatpush1.msra.mxu0 %v159
    %190 = vmatprep.subr.mxu0 0.0
    %191 = vmatpush1.msra.mxu0 %v158
    %192 = vmatprep.subr.mxu0 0.0
    %193 = vmatpush1.msra.mxu0 %v157
    %194 = vmatprep.subr.mxu0 0.0
    %195 = vmatpush1.msra.mxu0 %v156
    %196 = vmatprep.subr.mxu0 0.0
    %197 = vmatpush1.msra.mxu0 %v155
    %198 = vmatprep.subr.mxu0 0.0
    %199 = vmatpush1.msra.mxu0 %v154
    %200 = vmatprep.subr.mxu0 0.0
    %201 = vmatpush1.msra.mxu0 %v153
    %202 = vmatprep.subr.mxu0 0.0
    %203 = vmatpush1.msra.mxu0 %v152
    %204 = vmatprep.subr.mxu0 0.0
    %205 = vmatpush1.msra.mxu0 %v151
    %206 = vmatprep.subr.mxu0 0.0
    %207 = vmatpush2.msra.mxu0 0.0
    %208 = vmatprep.subr.mxu0 0.0
    %209 = vmatpush2.msra.mxu0 0.0
    %210 = vmatprep.subr.mxu0 0.0
    %211 = vmatpush2.msra.mxu0 0.0
    %212 = vmatprep.subr.mxu0 0.0
    %213 = vmatpush2.msra.mxu0 0.0
    %214 = vmatprep.subr.mxu0 0.0
    %215 = vmatpush2.msra.mxu0 0.0
    %216 = vmatprep.subr.mxu0 0.0
    %217 = vmatpush2.msra.mxu0 0.0
    %218 = vmatprep.subr.mxu0 0.0
    %219 = vmatpush2.msra.mxu0 0.0
    %220 = vmatprep.subr.mxu0 0.0
    %221 = vmatpush2.msra.mxu0 0.0
    %222 = vmatprep.subr.mxu0 0.0
    %223 = vmatpush2.msra.mxu0 0.0
    %224 = vmatprep.subr.mxu0 0.0
    %225 = vmatpush2.msra.mxu0 0.0
    %226 = vmatprep.subr.mxu0 0.0
    %227 = vmatpush2.msra.mxu0 0.0
    %228 = vmatprep.subr.mxu0 0.0
    %229 = vmatpush2.msra.mxu0 0.0
    %230 = vmatprep.subr.mxu0 0.0
    %231 = vmatpush2.msra.mxu0 0.0
    %232 = vmatprep.subr.mxu0 0.0
    %233 = vmatpush2.msra.mxu0 0.0
    %234 = vmatprep.subr.mxu0 0.0
    %235 = vmatpush2.msra.mxu0 0.0
    %236 = vmatprep.subr.mxu0 0.0
    %237 = vmatpush2.msra.mxu0 0.0
    %238 = vmatprep.mubr.f32.mxu0 0.0
    %239 = vmatmul.mubr.f32.gmra.mxu0 %v150
    %v240 = vpop.f32.mrf.mxu0
    %v241 = vadd.f32 %v172, %v240
    %v242 = vpop.f32.mrf.mxu0
    %243 = vdwg.mxu0
    %v244 = vsub.f32 0.0, %v241
    %v245 = vmul.f32 %v244, 1.442695
    %v246 = vpow.pop %v245
    %v247 = vadd.f32 %v246, 1.0
    %v248 = vrcp.pop %v247
    %v249 = vmul.f32 1.0, %v248
    %vm250 = vcmask 80896
    %251 = vst.msk [vmem:[#allocation8] sm:$0xff] %vm250, %v249
    // Predicated region
    $region34: #{tpu_custom_call.1} parent=1 // pred_check
      _
    $region35: #{tpu_custom_call.1} parent=1 // pred_check_branch
      %253 = sbr.rel (0) target = $region37
    $region36: #{tpu_custom_call.1} parent=1 // pred_region
      %s255 = ssub.s32 128, 128
      %256 = vsyncadd [#allocation4], %s255
      %s258 = sshll.u32 [#allocation8], 4
      %s259 = int_to_ptr.vmem [resolvable:$true] %s258
      %261 = dma.vmem_to_hbm [thread:$0]  %s259, 128, %s5, [#allocation4]
    $region37: #{tpu_custom_call.1} parent=1 // pred_fallthru
      _
    // Predicated region
    $region38: #{tpu_custom_call.1} parent=1 // pred_check
      _
    $region39: #{tpu_custom_call.1} parent=1 // pred_check_branch
      %263 = sbr.rel (0) target = $region41
    $region40: #{tpu_custom_call.1} parent=1 // pred_region
      %264 = dma.done [#allocation4], 128
    $region41: #{tpu_custom_call.1} parent=1 // pred_fallthru
      _
    %265 = vsyncpa [#allocation3], 1
    %266 = vsyncpa [#allocation6], 1
    %267 = vsyncpa [#allocation4], 1

</llo_original>
